<compile_context>
chip_gen: v7x
topology: tpu7x:2x2x1
jax: 0.10.0
libtpu: 0.0.40
codegen_flags: <defaults>
</compile_context>

<pallas_src>
import jax
import jax.numpy as jnp
from jax.experimental import pallas as pl
from jax.experimental.pallas import tpu as pltpu

LANE = 128          # lane width (last-dim granularity for weight / output padding)
SUBLANE_F32 = 8     # f32 sublane granularity (input feature padding)
BATCH_ALIGN = 16    # batch-tile granularity (bf16 sublane packing for intermediates)


def _round_up(x, m):
    return ((x + m - 1) // m) * m


def _cdiv(a, b):
    return (a + b - 1) // b


def _choose_batch_tile(B):
    """Batch tile: multiple of 16, capped at 1024 rows; for non-trivial B aim for
    >= 4 grid steps so the 'parallel' axis shards across v7x's 2 TensorCores."""
    B16 = _round_up(max(B, 1), BATCH_ALIGN)
    if B16 <= 64:               # tiny batch: one tile (no megacore win possible)
        return B16
    return min(1024, _round_up(_cdiv(B16, 4), BATCH_ALIGN))


def qnet_kernel(x_ref, w1_ref, w23_ref, b_ref, o_ref):
    """One batch tile of the fused 3-layer MLP.

    x_ref:   [TB, S_pad]  f32  activations (real feature width, sublane-aligned)
    w1_ref:  [S_pad, D]   bf16 layer-1 weight   (VMEM-resident across the grid)
    w23_ref: [2, D, D]    bf16 layer-2/3 weights (VMEM-resident across the grid)
    b_ref:   [3, D]       f32  stacked biases
    o_ref:   [TB, D]      bf16 lane-dense output; wrapper slices [:, :a_dim]
    """
    x = x_ref[...].astype(jnp.bfloat16)
    # Layer 1: bf16 MXU matmul, f32 accumulate; bias/ReLU stay f32 on the VPU.
    h = jnp.dot(x, w1_ref[...], preferred_element_type=jnp.float32) + b_ref[0:1, :]
    h = jnp.maximum(h, 0.0)
    # Layer 2.
    h = jnp.dot(h.astype(jnp.bfloat16), w23_ref[0],
                preferred_element_type=jnp.float32) + b_ref[1:2, :]
    h = jnp.maximum(h, 0.0)
    # Layer 3 (no activation).
    out = jnp.dot(h.astype(jnp.bfloat16), w23_ref[1],
                  preferred_element_type=jnp.float32) + b_ref[2:3, :]
    # TODO(synk): for a_dim << 128 at very large B, pack 128//a_dim rows into one
    # lane-dense row before the store (pltpu.roll / einshape) to cut writeback further.
    o_ref[...] = out.astype(o_ref.dtype)


def q_net_forward(x, packed):
    """Forward pass of Q_Net: relu(x@W1+b1) -> relu(.@W2+b2) -> .@W3+b3.

    x: [B, s_dim] float array.  packed: dict from init_params()/pack_params().
    Returns [B, a_dim] bf16 Q-values (cast to f32 by the caller if desired).
    """
    w1, w23, b_stack = packed["w1"], packed["w23"], packed["b_stack"]
    s_dim, a_dim = packed["s_dim"], packed["a_dim"]
    S_pad, D = packed["S_pad"], packed["D"]

    B = x.shape[0]
    TB = _choose_batch_tile(B)
    B_pad = _round_up(max(B, 1), TB)

    x = x.astype(jnp.float32)
    # Only pad what is strictly necessary (tiny vs the old [B_pad, D] bf16 round trip):
    # batch rows up to B_pad and feature cols up to the sublane-aligned S_pad.
    if B_pad != B or S_pad != s_dim:
        x = jnp.pad(x, ((0, B_pad - B), (0, S_pad - s_dim)))

    out = pl.pallas_call(
        qnet_kernel,
        out_shape=jax.ShapeDtypeStruct((B_pad, D), jnp.bfloat16),
        grid=(B_pad // TB,),
        in_specs=[
            pl.BlockSpec((TB, S_pad), lambda i: (i, 0)),     # activations: batch-tiled
            pl.BlockSpec((S_pad, D), lambda i: (0, 0)),      # W1: resident (constant block)
            pl.BlockSpec((2, D, D), lambda i: (0, 0, 0)),    # W2/W3: resident
            pl.BlockSpec((3, D), lambda i: (0, 0)),          # biases: resident
        ],
        out_specs=pl.BlockSpec((TB, D), lambda i: (i, 0)),
        compiler_params=pltpu.CompilerParams(
            dimension_semantics=("parallel",),   # shard batch tiles across v7x's 2 TCs
            vmem_limit_bytes=16 * 1024 * 1024,   # ~0.8 MB actually used at TB=1024
        ),
    )(x, w1, w23, b_stack)

    # Padded rows [B:B_pad] carry relu(b1)-propagated garbage; padded lanes [a_dim:D]
    # are exact zeros.  Both are dropped here.
    return out[:B, :a_dim]


def pack_params(raw, s_dim, a_dim, h_dim):
    """Done ONCE (not per call).  Zero padding keeps the math exact:
    - W1 -> [S_pad, D] with S_pad = round_up(s_dim, 8) (matches the un-padded x width),
    - W2, W3 -> one stacked bf16 [2, D, D] buffer with D = 128-multiple,
    - biases -> one f32 [3, D] buffer."""
    D = max(_round_up(h_dim, LANE), _round_up(a_dim, LANE))
    S_pad = _round_up(s_dim, SUBLANE_F32)

    w1 = (jnp.zeros((S_pad, D), jnp.float32)
          .at[:s_dim, :h_dim].set(raw["w1"])).astype(jnp.bfloat16)

    def pad_w(w):
        out = jnp.zeros((D, D), dtype=jnp.float32)
        return out.at[: w.shape[0], : w.shape[1]].set(w)

    def pad_b(b):
        return jnp.zeros((D,), dtype=jnp.float32).at[: b.shape[0]].set(b)

    w23 = jnp.stack([pad_w(raw["w2"]), pad_w(raw["w3"])]).astype(jnp.bfloat16)
    b_stack = jnp.stack([pad_b(raw["b1"]), pad_b(raw["b2"]), pad_b(raw["b3"])])

    return {"w1": w1, "w23": w23, "b_stack": b_stack,
            "s_dim": s_dim, "a_dim": a_dim, "h_dim": h_dim,
            "S_pad": S_pad, "D": D}


def init_params(key, s_dim, a_dim, h_dim=128):
    """Mirror Q_Net.build_network: weights ~ N(0, 0.1) (the module's custom init);
    biases keep nn.Linear's default U(-1/sqrt(fan_in), 1/sqrt(fan_in))."""
    ks = jax.random.split(key, 6)

    def w(k, fan_in, fan_out):
        return 0.1 * jax.random.normal(k, (fan_in, fan_out), dtype=jnp.float32)

    def b(k, fan_in, fan_out):
        bound = 1.0 / jnp.sqrt(jnp.float32(fan_in))
        return jax.random.uniform(k, (fan_out,), dtype=jnp.float32,
                                  minval=-bound, maxval=bound)

    raw = {
        "w1": w(ks[0], s_dim, h_dim), "b1": b(ks[1], s_dim, h_dim),
        "w2": w(ks[2], h_dim, h_dim), "b2": b(ks[3], h_dim, h_dim),
        "w3": w(ks[4], h_dim, a_dim), "b3": b(ks[5], h_dim, a_dim),
    }
    return raw, pack_params(raw, s_dim, a_dim, h_dim)


if __name__ == "__main__":
    key = jax.random.PRNGKey(0)
    k_params, k_x = jax.random.split(key)

    B, s_dim, a_dim, h_dim = 8, 16, 8, 128
    raw, packed = init_params(k_params, s_dim, a_dim, h_dim)
    x = jax.random.normal(k_x, (B, s_dim), dtype=jnp.float32)

    q_values = q_net_forward(x, packed)
    jax.block_until_ready(q_values)
    assert q_values.shape == (B, a_dim)
    q_f32 = q_values.astype(jnp.float32)

    # Reference 1: pure-JAX with the same bf16-weight / f32-accumulate recipe
    # (tolerance covers the kernel's final bf16 output cast).
    w1 = raw["w1"].astype(jnp.bfloat16)
    w2 = raw["w2"].astype(jnp.bfloat16)
    w3 = raw["w3"].astype(jnp.bfloat16)
    xb = x.astype(jnp.bfloat16)
    h1 = jnp.maximum(jnp.dot(xb, w1, preferred_element_type=jnp.float32) + raw["b1"], 0.0)
    h2 = jnp.maximum(jnp.dot(h1.astype(jnp.bfloat16), w2,
                             preferred_element_type=jnp.float32) + raw["b2"], 0.0)
    ref = jnp.dot(h2.astype(jnp.bfloat16), w3,
                  preferred_element_type=jnp.float32) + raw["b3"]
    assert jnp.allclose(q_f32, ref, atol=1e-2, rtol=1e-2), \
        float(jnp.max(jnp.abs(q_f32 - ref)))

    # Reference 2: full f32 math (looser tolerance: weights/activations/output in bf16).
    h1f = jnp.maximum(x @ raw["w1"] + raw["b1"], 0.0)
    h2f = jnp.maximum(h1f @ raw["w2"] + raw["b2"], 0.0)
    ref_f32 = h2f @ raw["w3"] + raw["b3"]
    assert jnp.allclose(q_f32, ref_f32, atol=5e-2, rtol=5e-2), \
        float(jnp.max(jnp.abs(q_f32 - ref_f32)))

    print("KERNEL_OK")
</pallas_src>

<mosaic_0001>
module attributes {stable_mosaic.version = 11 : i64} {
  func.func @qnet_kernel(%arg0: i32, %arg1: memref<16x16xf32, #tpu.memory_space<vmem>>, %arg2: memref<16x128xbf16, #tpu.memory_space<vmem>>, %arg3: memref<2x128x128xbf16, #tpu.memory_space<vmem>>, %arg4: memref<3x128xf32, #tpu.memory_space<vmem>>, %arg5: memref<16x128xbf16, #tpu.memory_space<vmem>>) attributes {dimension_semantics = [#tpu.dimension_semantics<parallel>], iteration_bounds = array<i64: 1>, scalar_prefetch = 0 : i64, scratch_operands = 0 : i64, tpu.core_type = #tpu.core_type<tc>, window_params = [{transform_indices = @transform_0, window_bounds = array<i64: 16, 16>}, {pipeline_mode = #tpu.pipeline_mode<synchronous>, transform_indices = @transform_1, window_bounds = array<i64: 16, 128>}, {pipeline_mode = #tpu.pipeline_mode<synchronous>, transform_indices = @transform_2, window_bounds = array<i64: 2, 128, 128>}, {pipeline_mode = #tpu.pipeline_mode<synchronous>, transform_indices = @transform_3, window_bounds = array<i64: 3, 128>}, {transform_indices = @transform_4, window_bounds = array<i64: 16, 128>}]} {
    %c0 = arith.constant 0 : index
    %c0_0 = arith.constant 0 : index
    %0 = vector.load %arg1[%c0, %c0_0] : memref<16x16xf32, #tpu.memory_space<vmem>>, vector<16x16xf32>
    %1 = arith.truncf %0 : vector<16x16xf32> to vector<16x16xbf16>
    %c0_1 = arith.constant 0 : index
    %c0_2 = arith.constant 0 : index
    %2 = vector.load %arg2[%c0_1, %c0_2] : memref<16x128xbf16, #tpu.memory_space<vmem>>, vector<16x128xbf16>
    %cst = arith.constant dense<0.000000e+00> : vector<16x128xf32>
    %3 = tpu.matmul %1, %2, %cst {dimension_numbers = #tpu.dot_dimension_numbers<[1], [0], [0], [1], [0, 0, 1, 1], [], []>} : vector<16x16xbf16>, vector<16x128xbf16>, vector<16x128xf32> -> vector<16x128xf32>
    %c0_3 = arith.constant 0 : index
    %c0_4 = arith.constant 0 : index
    %4 = vector.load %arg4[%c0_3, %c0_4] : memref<3x128xf32, #tpu.memory_space<vmem>>, vector<1x128xf32>
    %5 = vector.broadcast %4 : vector<1x128xf32> to vector<16x128xf32>
    %6 = arith.addf %3, %5 : vector<16x128xf32>
    %cst_5 = arith.constant 0.000000e+00 : f32
    %7 = vector.broadcast %cst_5 : f32 to vector<16x128xf32>
    %8 = arith.maximumf %6, %7 : vector<16x128xf32>
    %9 = arith.truncf %8 : vector<16x128xf32> to vector<16x128xbf16>
    %c0_6 = arith.constant 0 : index
    %c0_7 = arith.constant 0 : index
    %c0_8 = arith.constant 0 : index
    %10 = vector.load %arg3[%c0_6, %c0_7, %c0_8] : memref<2x128x128xbf16, #tpu.memory_space<vmem>>, vector<1x128x128xbf16>
    %11 = vector.shape_cast %10 : vector<1x128x128xbf16> to vector<128x128xbf16>
    %cst_9 = arith.constant dense<0.000000e+00> : vector<16x128xf32>
    %12 = tpu.matmul %9, %11, %cst_9 {dimension_numbers = #tpu.dot_dimension_numbers<[1], [0], [0], [1], [0, 0, 1, 1], [], []>} : vector<16x128xbf16>, vector<128x128xbf16>, vector<16x128xf32> -> vector<16x128xf32>
    %c1 = arith.constant 1 : index
    %c0_10 = arith.constant 0 : index
    %13 = vector.load %arg4[%c1, %c0_10] : memref<3x128xf32, #tpu.memory_space<vmem>>, vector<1x128xf32>
    %14 = vector.broadcast %13 : vector<1x128xf32> to vector<16x128xf32>
    %15 = arith.addf %12, %14 : vector<16x128xf32>
    %cst_11 = arith.constant 0.000000e+00 : f32
    %16 = vector.broadcast %cst_11 : f32 to vector<16x128xf32>
    %17 = arith.maximumf %15, %16 : vector<16x128xf32>
    %18 = arith.truncf %17 : vector<16x128xf32> to vector<16x128xbf16>
    %c1_12 = arith.constant 1 : index
    %c0_13 = arith.constant 0 : index
    %c0_14 = arith.constant 0 : index
    %19 = vector.load %arg3[%c1_12, %c0_13, %c0_14] : memref<2x128x128xbf16, #tpu.memory_space<vmem>>, vector<1x128x128xbf16>
    %20 = vector.shape_cast %19 : vector<1x128x128xbf16> to vector<128x128xbf16>
    %cst_15 = arith.constant dense<0.000000e+00> : vector<16x128xf32>
    %21 = tpu.matmul %18, %20, %cst_15 {dimension_numbers = #tpu.dot_dimension_numbers<[1], [0], [0], [1], [0, 0, 1, 1], [], []>} : vector<16x128xbf16>, vector<128x128xbf16>, vector<16x128xf32> -> vector<16x128xf32>
    %c2 = arith.constant 2 : index
    %c0_16 = arith.constant 0 : index
    %22 = vector.load %arg4[%c2, %c0_16] : memref<3x128xf32, #tpu.memory_space<vmem>>, vector<1x128xf32>
    %23 = vector.broadcast %22 : vector<1x128xf32> to vector<16x128xf32>
    %24 = arith.addf %21, %23 : vector<16x128xf32>
    %25 = arith.truncf %24 : vector<16x128xf32> to vector<16x128xbf16>
    %c0_17 = arith.constant 0 : index
    %c0_18 = arith.constant 0 : index
    %26 = vector.load %arg5[%c0_17, %c0_18] : memref<16x128xbf16, #tpu.memory_space<vmem>>, vector<16x128xbf16>
    tpu.vector_store %arg5[%c0_17, %c0_18], %25 {strides = array<i32>} : memref<16x128xbf16, #tpu.memory_space<vmem>>, vector<16x128xbf16>,
    return
  }
  func.func @transform_0(%arg0: i32) -> (i32, i32) {
    %c0_i32 = arith.constant 0 : i32
    %c0_i32_0 = arith.constant 0 : i32
    return %arg0, %c0_i32 : i32, i32
  }
  func.func @transform_1(%arg0: i32) -> (i32, i32) {
    %c0_i32 = arith.constant 0 : i32
    %c0_i32_0 = arith.constant 0 : i32
    %c0_i32_1 = arith.constant 0 : i32
    return %c0_i32, %c0_i32_0 : i32, i32
  }
  func.func @transform_2(%arg0: i32) -> (i32, i32, i32) {
    %c0_i32 = arith.constant 0 : i32
    %c0_i32_0 = arith.constant 0 : i32
    %c0_i32_1 = arith.constant 0 : i32
    %c0_i32_2 = arith.constant 0 : i32
    return %c0_i32, %c0_i32_0, %c0_i32_1 : i32, i32, i32
  }
  func.func @transform_3(%arg0: i32) -> (i32, i32) {
    %c0_i32 = arith.constant 0 : i32
    %c0_i32_0 = arith.constant 0 : i32
    %c0_i32_1 = arith.constant 0 : i32
    return %c0_i32, %c0_i32_0 : i32, i32
  }
  func.func @transform_4(%arg0: i32) -> (i32, i32) {
    %c0_i32 = arith.constant 0 : i32
    %c0_i32_0 = arith.constant 0 : i32
    return %arg0, %c0_i32 : i32, i32
  }
}

</mosaic_0001>

<llo_original>
// kernel: tpu_custom_call.1
$region0: #{tpu_custom_call.1}
  #allocation0 [shape = 'u32[]', space=smem, size = 0x4, offset = 0x4, fixed_abs, tag = 'smem constant byte address 0x4 - core index']
  #allocation1 [shape = 'u32[144,128]{1,0:T(1,128)}', space=vmem, size = 0x12000, scoped, tag = 'internal scratch']
  %s0 = inlined_call_operand.hbm [shape: f32[16,16], index: 0, kind: input, shape index: {}]
  %s1 = inlined_call_operand.hbm [shape: bf16[16,128], index: 1, kind: input, shape index: {}]
  %s2 = inlined_call_operand.hbm [shape: bf16[2,128,128], index: 2, kind: input, shape index: {}]
  %s3 = inlined_call_operand.vmem [shape: f32[3,128], index: 3, kind: input, shape index: {}]
  %s4 = inlined_call_operand.hbm [shape: bf16[16,128], index: 4, kind: output, shape index: {}]
  %s5 = sld [smem:[#allocation0]]
  $region38: #{tpu_custom_call.1} parent=0
    _
  %s7 = ssub.s32 1, %s5
  %s8 = scalar_select 0, %s7, %s5
  $region1: #{tpu_custom_call.1} parent=0
    #allocation2 [shape = 'u8[8192]{0}', space=vmem, size = 0x2000, scoped, tag = 'input window, operand 0, single buffered']
    #allocation3 [shape = 's32[1]{0}', space=sflag, size = 0x4, scoped, tag = 'scoped memory for tpu_custom_call.1']
    #allocation4 [shape = 's32[1]{0}', space=sflag, size = 0x4, scoped, tag = 'scoped memory for tpu_custom_call.1']
    #allocation5 [shape = 'u8[4096]{0}', space=vmem, size = 0x1000, scoped, tag = 'input window, operand 1, single buffered']
    #allocation6 [shape = 's32[1]{0}', space=sflag, size = 0x4, scoped, tag = 'scoped memory for tpu_custom_call.1']
    #allocation7 [shape = 'u8[65536]{0}', space=vmem, size = 0x10000, scoped, tag = 'input window, operand 2, single buffered']
    #allocation8 [shape = 'u8[4096]{0}', space=vmem, size = 0x1000, scoped, tag = 'output window, operand 0, single buffered']
    %9 = vsyncpa [#allocation3], 0
    %10 = vsyncpa [#allocation6], 0
    %11 = vsyncpa [#allocation4], 0
    // Predicated region
    $region2: #{tpu_custom_call.1} parent=1 // pred_check
      _
    $region3: #{tpu_custom_call.1} parent=1 // pred_check_branch
      %13 = sbr.rel (0) target = $region5
    $region4: #{tpu_custom_call.1} parent=1 // pred_region
      %s15 = ssub.s32 256, 256
      %16 = vsyncadd [#allocation3], %s15
      %s17 = sshll.u32 [#allocation2], 4
      %s18 = int_to_ptr.vmem [resolvable:$true] %s17
      %23 = dma.hbm_to_vmem [thread:$0]  %s0, 256, %s18, [#allocation3], 128, 128, 8
    $region5: #{tpu_custom_call.1} parent=1 // pred_fallthru
      _
    // Predicated region
    $region6: #{tpu_custom_call.1} parent=1 // pred_check
      _
    $region7: #{tpu_custom_call.1} parent=1 // pred_check_branch
      %25 = sbr.rel (0) target = $region9
    $region8: #{tpu_custom_call.1} parent=1 // pred_region
      %s27 = ssub.s32 128, 128
      %28 = vsyncadd [#allocation6], %s27
      %s29 = sshll.u32 [#allocation5], 4
      %s30 = int_to_ptr.vmem [resolvable:$true] %s29
      %35 = dma.hbm_to_vmem [thread:$0]  %s1, 128, %s30, [#allocation6], 64, 64, 4
    $region9: #{tpu_custom_call.1} parent=1 // pred_fallthru
      _
    // Predicated region
    $region10: #{tpu_custom_call.1} parent=1 // pred_check
      _
    $region11: #{tpu_custom_call.1} parent=1 // pred_check_branch
      %37 = sbr.rel (0) target = $region13
    $region12: #{tpu_custom_call.1} parent=1 // pred_region
      %s39 = ssub.s32 2048, 2048
      %40 = vsyncadd [#allocation6], %s39
      %s41 = sshll.u32 [#allocation7], 4
      %s42 = int_to_ptr.vmem [resolvable:$true] %s41
      %47 = dma.hbm_to_vmem [thread:$0]  %s2, 2048, %s42, [#allocation6], 64, 64, 4
    $region13: #{tpu_custom_call.1} parent=1 // pred_fallthru
      _
    // Predicated region
    $region14: #{tpu_custom_call.1} parent=1 // pred_check
      _
    $region15: #{tpu_custom_call.1} parent=1 // pred_check_branch
      %49 = sbr.rel (0) target = $region17
    $region16: #{tpu_custom_call.1} parent=1 // pred_region
      _
    $region17: #{tpu_custom_call.1} parent=1 // pred_fallthru
      _
    // Predicated region
    $region18: #{tpu_custom_call.1} parent=1 // pred_check
      _
    $region19: #{tpu_custom_call.1} parent=1 // pred_check_branch
      %51 = sbr.rel (0) target = $region21
    $region20: #{tpu_custom_call.1} parent=1 // pred_region
      %52 = dma.done [#allocation3], 256
    $region21: #{tpu_custom_call.1} parent=1 // pred_fallthru
      _
    // Predicated region
    $region22: #{tpu_custom_call.1} parent=1 // pred_check
      _
    $region23: #{tpu_custom_call.1} parent=1 // pred_check_branch
      %54 = sbr.rel (0) target = $region25
    $region24: #{tpu_custom_call.1} parent=1 // pred_region
      %55 = dma.done [#allocation6], 128
    $region25: #{tpu_custom_call.1} parent=1 // pred_fallthru
      _
    // Predicated region
    $region26: #{tpu_custom_call.1} parent=1 // pred_check
      _
    $region27: #{tpu_custom_call.1} parent=1 // pred_check_branch
      %57 = sbr.rel (0) target = $region29
    $region28: #{tpu_custom_call.1} parent=1 // pred_region
      %58 = dma.done [#allocation6], 2048
    $region29: #{tpu_custom_call.1} parent=1 // pred_fallthru
      _
    %v60 = vld [vmem:[#allocation2] sm:$0xff]
    %v61 = vld [vmem:[#allocation2 + $0x8] sm:$0xff]
    %v62 = vpack.c.bf16 %v61, %v60
    %v63 = vld [vmem:[#allocation5] sm:$0xf]
    %v64 = vld [vmem:[#allocation5 + $0x4] sm:$0xf]
    %v65 = vld [vmem:[%s3] sm:$0x1]
    %v66 = vlaneseq
    %v67 = vshrl.u32 %v66, 7
    %v68 = vsub.s32 0, %v67
    %v69 = vrot.slane %v65, %v68
    %v72 = vunpack.c.l.b16 %v63
    %v73 = vunpack.c.l.b16 %v64
    %v74 = vpack.c.b16 %v73, %v72
    %vm76 = vcmask 130048
    %v78 = vsel %vm76, %v62, 0
    %80 = vmatprep.subr.bf16.mxu0 0
    %81 = vmatpush1.bf16.msra.mxu0 %v74
    %82 = vmatprep.subr.bf16.mxu0 0
    %83 = vmatpush1.bf16.msra.mxu0 0
    %84 = vmatprep.subr.bf16.mxu0 0
    %85 = vmatpush1.bf16.msra.mxu0 0
    %86 = vmatprep.subr.bf16.mxu0 0
    %87 = vmatpush1.bf16.msra.mxu0 0
    %88 = vmatprep.subr.bf16.mxu0 0
    %89 = vmatpush1.bf16.msra.mxu0 0
    %90 = vmatprep.subr.bf16.mxu0 0
    %91 = vmatpush1.bf16.msra.mxu0 0
    %92 = vmatprep.subr.bf16.mxu0 0
    %93 = vmatpush1.bf16.msra.mxu0 0
    %94 = vmatprep.subr.bf16.mxu0 0
    %95 = vmatpush1.bf16.msra.mxu0 0
    %96 = vmatprep.subr.bf16.mxu0 0
    %97 = vmatpush1.bf16.msra.mxu0 0
    %98 = vmatprep.subr.bf16.mxu0 0
    %99 = vmatpush1.bf16.msra.mxu0 0
    %100 = vmatprep.subr.bf16.mxu0 0
    %101 = vmatpush1.bf16.msra.mxu0 0
    %102 = vmatprep.subr.bf16.mxu0 0
    %103 = vmatpush1.bf16.msra.mxu0 0
    %104 = vmatprep.subr.bf16.mxu0 0
    %105 = vmatpush1.bf16.msra.mxu0 0
    %106 = vmatprep.subr.bf16.mxu0 0
    %107 = vmatpush1.bf16.msra.mxu0 0
    %108 = vmatprep.subr.bf16.mxu0 0
    %109 = vmatpush1.bf16.msra.mxu0 0
    %110 = vmatprep.subr.bf16.mxu0 0
    %111 = vmatpush1.bf16.msra.mxu0 0
    %112 = vmatprep.mubr.bf16.mxu0 0
    %113 = vmatmul.mubr.bf16.gmra.mrb[0].mxu0 %v78
    %v114 = vpop.f32.mrb[0].mxu0
    %v115 = vadd.f32 %v69, %v114
    %v116 = vpop.f32.mrb[0].mxu0
    %v117 = vpop.f32.mrb[0].mxu0
    %v118 = vadd.f32 %v69, %v117
    %v119 = vpop.f32.mrb[0].mxu0
    %120 = vdwg.mxu0
    %v121 = vmax.f32 %v115, 0.0
    %v122 = vmax.f32 %v118, 0.0
    %v123 = vpack.c.bf16 %v122, %v121
    %v124 = vld [vmem:[#allocation7] sm:$0xf]
    %v125 = vld [vmem:[#allocation7 + $0x4] sm:$0xf]
    %v126 = vld [vmem:[#allocation7 + $0x8] sm:$0xf]
    %v127 = vld [vmem:[#allocation7 + $0xc] sm:$0xf]
    %v128 = vld [vmem:[#allocation7 + $0x10] sm:$0xf]
    %v129 = vld [vmem:[#allocation7 + $0x14] sm:$0xf]
    %v130 = vld [vmem:[#allocation7 + $0x18] sm:$0xf]
    %v131 = vld [vmem:[#allocation7 + $0x1c] sm:$0xf]
    %v132 = vld [vmem:[#allocation7 + $0x20] sm:$0xf]
    %v133 = vld [vmem:[#allocation7 + $0x24] sm:$0xf]
    %v134 = vld [vmem:[#allocation7 + $0x28] sm:$0xf]
    %v135 = vld [vmem:[#allocation7 + $0x2c] sm:$0xf]
    %v136 = vld [vmem:[#allocation7 + $0x30] sm:$0xf]
    %v137 = vld [vmem:[#allocation7 + $0x34] sm:$0xf]
    %v138 = vld [vmem:[#allocation7 + $0x38] sm:$0xf]
    %v139 = vld [vmem:[#allocation7 + $0x3c] sm:$0xf]
    %v140 = vld [vmem:[%s3 + $0x1] sm:$0x1]
    %v141 = vlaneseq
    %v142 = vshrl.u32 %v141, 7
    %v143 = vsub.s32 0, %v142
    %v144 = vrot.slane %v140, %v143
    %v161 = vunpack.c.l.b16 %v124
    %v162 = vunpack.c.l.b16 %v125
    %v163 = vunpack.c.l.b16 %v126
    %v164 = vunpack.c.l.b16 %v127
    %v165 = vunpack.c.l.b16 %v128
    %v166 = vunpack.c.l.b16 %v129
    %v167 = vunpack.c.l.b16 %v130
    %v168 = vunpack.c.l.b16 %v131
    %v169 = vunpack.c.l.b16 %v132
    %v170 = vunpack.c.l.b16 %v133
    %v171 = vunpack.c.l.b16 %v134
    %v172 = vunpack.c.l.b16 %v135
    %v173 = vunpack.c.l.b16 %v136
    %v174 = vunpack.c.l.b16 %v137
    %v175 = vunpack.c.l.b16 %v138
    %v176 = vunpack.c.l.b16 %v139
    %v177 = vpack.c.b16 %v162, %v161
    %v178 = vpack.c.b16 %v164, %v163
    %v179 = vpack.c.b16 %v166, %v165
    %v180 = vpack.c.b16 %v168, %v167
    %v181 = vpack.c.b16 %v170, %v169
    %v182 = vpack.c.b16 %v172, %v171
    %v183 = vpack.c.b16 %v174, %v173
    %v184 = vpack.c.b16 %v176, %v175
    %193 = vmatprep.subr.bf16.mxu0 0
    %194 = vmatpush1.bf16.msra.mxu0 %v177
    %195 = vmatprep.subr.bf16.mxu0 0
    %196 = vmatpush1.bf16.msra.mxu0 %v178
    %197 = vmatprep.subr.bf16.mxu0 0
    %198 = vmatpush1.bf16.msra.mxu0 %v179
    %199 = vmatprep.subr.bf16.mxu0 0
    %200 = vmatpush1.bf16.msra.mxu0 %v180
    %201 = vmatprep.subr.bf16.mxu0 0
    %202 = vmatpush1.bf16.msra.mxu0 %v181
    %203 = vmatprep.subr.bf16.mxu0 0
    %204 = vmatpush1.bf16.msra.mxu0 %v182
    %205 = vmatprep.subr.bf16.mxu0 0
    %206 = vmatpush1.bf16.msra.mxu0 %v183
    %207 = vmatprep.subr.bf16.mxu0 0
    %208 = vmatpush1.bf16.msra.mxu0 %v184
    %209 = vmatprep.subr.bf16.mxu0 0
    %210 = vmatpush1.bf16.msra.mxu0 0
    %211 = vmatprep.subr.bf16.mxu0 0
    %212 = vmatpush1.bf16.msra.mxu0 0
    %213 = vmatprep.subr.bf16.mxu0 0
    %214 = vmatpush1.bf16.msra.mxu0 0
    %215 = vmatprep.subr.bf16.mxu0 0
    %216 = vmatpush1.bf16.msra.mxu0 0
    %217 = vmatprep.subr.bf16.mxu0 0
    %218 = vmatpush1.bf16.msra.mxu0 0
    %219 = vmatprep.subr.bf16.mxu0 0
    %220 = vmatpush1.bf16.msra.mxu0 0
    %221 = vmatprep.subr.bf16.mxu0 0
    %222 = vmatpush1.bf16.msra.mxu0 0
    %223 = vmatprep.subr.bf16.mxu0 0
    %224 = vmatpush1.bf16.msra.mxu0 0
    %225 = vmatprep.mubr.bf16.mxu0 0
    %226 = vmatmul.mubr.bf16.gmra.mrb[0].mxu0 %v123
    %v227 = vpop.f32.mrb[0].mxu0
    %v228 = vadd.f32 %v144, %v227
    %v229 = vpop.f32.mrb[0].mxu0
    %v230 = vpop.f32.mrb[0].mxu0
    %v231 = vadd.f32 %v144, %v230
    %v232 = vpop.f32.mrb[0].mxu0
    %233 = vdwg.mxu0
    %v234 = vmax.f32 %v228, 0.0
    %v235 = vmax.f32 %v231, 0.0
    %v236 = vpack.c.bf16 %v235, %v234
    %s237 = scalar_lea.vmem [#allocation7], 64
    %v238 = vld [vmem:[%s237] sm:$0xf]
    %v239 = vld [vmem:[%s237 + $0x4] sm:$0xf]
    %v240 = vld [vmem:[%s237 + $0x8] sm:$0xf]
    %v241 = vld [vmem:[%s237 + $0xc] sm:$0xf]
    %v242 = vld [vmem:[%s237 + $0x10] sm:$0xf]
    %v243 = vld [vmem:[%s237 + $0x14] sm:$0xf]
    %v244 = vld [vmem:[%s237 + $0x18] sm:$0xf]
    %v245 = vld [vmem:[%s237 + $0x1c] sm:$0xf]
    %v246 = vld [vmem:[%s237 + $0x20] sm:$0xf]
    %v247 = vld [vmem:[%s237 + $0x24] sm:$0xf]
    %v248 = vld [vmem:[%s237 + $0x28] sm:$0xf]
    %v249 = vld [vmem:[%s237 + $0x2c] sm:$0xf]
    %v250 = vld [vmem:[%s237 + $0x30] sm:$0xf]
    %v251 = vld [vmem:[%s237 + $0x34] sm:$0xf]
    %v252 = vld [vmem:[%s237 + $0x38] sm:$0xf]
    %v253 = vld [vmem:[%s237 + $0x3c] sm:$0xf]
    %v254 = vld [vmem:[%s3 + $0x2] sm:$0x1]
    %v255 = vlaneseq
    %v256 = vshrl.u32 %v255, 7
    %v257 = vsub.s32 0, %v256
    %v258 = vrot.slane %v254, %v257
    %v275 = vunpack.c.l.b16 %v238
    %v276 = vunpack.c.l.b16 %v239
    %v277 = vunpack.c.l.b16 %v240
    %v278 = vunpack.c.l.b16 %v241
    %v279 = vunpack.c.l.b16 %v242
    %v280 = vunpack.c.l.b16 %v243
    %v281 = vunpack.c.l.b16 %v244
    %v282 = vunpack.c.l.b16 %v245
    %v283 = vunpack.c.l.b16 %v246
    %v284 = vunpack.c.l.b16 %v247
    %v285 = vunpack.c.l.b16 %v248
    %v286 = vunpack.c.l.b16 %v249
    %v287 = vunpack.c.l.b16 %v250
    %v288 = vunpack.c.l.b16 %v251
    %v289 = vunpack.c.l.b16 %v252
    %v290 = vunpack.c.l.b16 %v253
    %v291 = vpack.c.b16 %v276, %v275
    %v292 = vpack.c.b16 %v278, %v277
    %v293 = vpack.c.b16 %v280, %v279
    %v294 = vpack.c.b16 %v282, %v281
    %v295 = vpack.c.b16 %v284, %v283
    %v296 = vpack.c.b16 %v286, %v285
    %v297 = vpack.c.b16 %v288, %v287
    %v298 = vpack.c.b16 %v290, %v289
    %307 = vmatprep.subr.bf16.mxu0 0
    %308 = vmatpush1.bf16.msra.mxu0 %v291
    %309 = vmatprep.subr.bf16.mxu0 0
    %310 = vmatpush1.bf16.msra.mxu0 %v292
    %311 = vmatprep.subr.bf16.mxu0 0
    %312 = vmatpush1.bf16.msra.mxu0 %v293
    %313 = vmatprep.subr.bf16.mxu0 0
    %314 = vmatpush1.bf16.msra.mxu0 %v294
    %315 = vmatprep.subr.bf16.mxu0 0
    %316 = vmatpush1.bf16.msra.mxu0 %v295
    %317 = vmatprep.subr.bf16.mxu0 0
    %318 = vmatpush1.bf16.msra.mxu0 %v296
    %319 = vmatprep.subr.bf16.mxu0 0
    %320 = vmatpush1.bf16.msra.mxu0 %v297
    %321 = vmatprep.subr.bf16.mxu0 0
    %322 = vmatpush1.bf16.msra.mxu0 %v298
    %323 = vmatprep.subr.bf16.mxu0 0
    %324 = vmatpush1.bf16.msra.mxu0 0
    %325 = vmatprep.subr.bf16.mxu0 0
    %326 = vmatpush1.bf16.msra.mxu0 0
    %327 = vmatprep.subr.bf16.mxu0 0
    %328 = vmatpush1.bf16.msra.mxu0 0
    %329 = vmatprep.subr.bf16.mxu0 0
    %330 = vmatpush1.bf16.msra.mxu0 0
    %331 = vmatprep.subr.bf16.mxu0 0
    %332 = vmatpush1.bf16.msra.mxu0 0
    %333 = vmatprep.subr.bf16.mxu0 0
    %334 = vmatpush1.bf16.msra.mxu0 0
    %335 = vmatprep.subr.bf16.mxu0 0
    %336 = vmatpush1.bf16.msra.mxu0 0
    %337 = vmatprep.subr.bf16.mxu0 0
    %338 = vmatpush1.bf16.msra.mxu0 0
    %339 = vmatprep.mubr.bf16.mxu0 0
    %340 = vmatmul.mubr.bf16.gmra.mrb[0].mxu0 %v236
    %v341 = vpop.f32.mrb[0].mxu0
    %v342 = vadd.f32 %v258, %v341
    %v343 = vpop.f32.mrb[0].mxu0
    %v344 = vpop.f32.mrb[0].mxu0
    %v345 = vadd.f32 %v258, %v344
    %v346 = vpop.f32.mrb[0].mxu0
    %347 = vdwg.mxu0
    %v348 = vpack.c.bf16 %v345, %v342
    %v350 = vunpack.c.l.b16 %v348
    %v351 = vunpack.c.h.b16 %v348
    %v352 = vpack.c.b16 %v350, %v350
    %v353 = vpack.c.b16 %v351, %v351
    %356 = vst [vmem:[#allocation8] sm:$0xf] %v352
    %357 = vst [vmem:[#allocation8 + $0x4] sm:$0xf] %v353
    // Predicated region
    $region30: #{tpu_custom_call.1} parent=1 // pred_check
      _
    $region31: #{tpu_custom_call.1} parent=1 // pred_check_branch
      %359 = sbr.rel (0) target = $region33
    $region32: #{tpu_custom_call.1} parent=1 // pred_region
      %s361 = ssub.s32 128, 128
      %362 = vsyncadd [#allocation4], %s361
      %s363 = sshll.u32 [#allocation8], 4
      %s364 = int_to_ptr.vmem [resolvable:$true] %s363
      %369 = dma.vmem_to_hbm [thread:$0]  %s364, 128, %s4, [#allocation4], 64, 64, 4
    $region33: #{tpu_custom_call.1} parent=1 // pred_fallthru
      _
    // Predicated region
    $region34: #{tpu_custom_call.1} parent=1 // pred_check
      _
    $region35: #{tpu_custom_call.1} parent=1 // pred_check_branch
      %371 = sbr.rel (0) target = $region37
    $region36: #{tpu_custom_call.1} parent=1 // pred_region
      %372 = dma.done [#allocation4], 128
    $region37: #{tpu_custom_call.1} parent=1 // pred_fallthru
      _
    %373 = vsyncpa [#allocation3], 1
    %374 = vsyncpa [#allocation6], 1
    %375 = vsyncpa [#allocation4], 1

</llo_original>
